<compile_context>
chip_gen: v7x
topology: tpu7x:2x2x1
jax: 0.10.0
libtpu: 0.0.40
codegen_flags: <defaults>
</compile_context>

<pallas_src>
import functools

import jax
import jax.numpy as jnp
import numpy as np
from jax.experimental import pallas as pl
from jax.experimental.pallas import tpu as pltpu

EPSILON = 1e-10
# Stand-in for PyTorch's masked_fill(-inf): a large finite negative gives
# exp(...) == 0 for masked keys (same as exp(-inf)) while keeping fully-masked
# query rows NaN-free (deliberate, documented deviation).
NEG_INF = -1e30


# ------------------------------- Pallas kernel -------------------------------

def _pointer_decoder_kernel(inp_ref, ctx_ref, mask_ref, w_out_ref, w_sw_ref,
                            b_sw_ref, out_ref, wgt_ref, sw_ref, *, d_hid):
    inp = inp_ref[0]           # (Lq, D)  f32
    ctx = ctx_ref[0]           # (Lk, D)  f32
    mask = mask_ref[0]         # (1, Lk)  f32, 1.0 == masked

    # --- dot-attention scores + mask + softmax (+ EPSILON) -------------------
    s = jnp.dot(inp, ctx.T, preferred_element_type=jnp.float32)       # (Lq, Lk)
    s = jnp.where(mask > 0.0, jnp.float32(NEG_INF), s)
    s = s - jnp.max(s, axis=-1, keepdims=True)
    e = jnp.exp(s)
    denom = jnp.sum(e, axis=-1, keepdims=True)
    w = e * pl.reciprocal(denom, approx=True) + jnp.float32(EPSILON)  # (Lq, Lk)
    wgt_ref[0] = w

    # --- attention readout ----------------------------------------------------
    ctx_att = jnp.dot(w, ctx, preferred_element_type=jnp.float32)     # (Lq, D)

    # --- linear_out(cat([input, ctx_att])) + tanh; concat folded into
    #     split-weight matmuls --------------------------------------------------
    w_out = w_out_ref[...]                                            # (2D, D)
    out = jnp.tanh(
        jnp.dot(inp, w_out[:d_hid, :], preferred_element_type=jnp.float32)
        + jnp.dot(ctx_att, w_out[d_hid:, :], preferred_element_type=jnp.float32))
    out_ref[0] = out

    # --- vocab pointer switch: sigmoid(cat([input, out]) @ W_sw^T + b) --------
    w_sw = w_sw_ref[...]                                              # (2D, 1)
    logit = (jnp.dot(inp, w_sw[:d_hid, :], preferred_element_type=jnp.float32)
             + jnp.dot(out, w_sw[d_hid:, :], preferred_element_type=jnp.float32)
             + b_sw_ref[...])                                         # (Lq, 1)
    sw_ref[0] = jax.nn.sigmoid(logit)


# --------------------------------- wrapper -----------------------------------

def pointer_decoder_forward(params, inp, context_question, atten_mask):
    """PointerDecoder.forward (eval mode).

    inp:              (B, Lq, d_hid)  float
    context_question: (B, Lk, d_hid)  float
    atten_mask:       (B, Lk)         bool, True == masked key
    returns (context_question_outputs (B,Lq,d_hid),
             context_question_weight  (B,Lq,Lk),
             vocab_pointer_switches   (B,Lq,1))
    """
    B, Lq, D = inp.shape
    Lk = context_question.shape[1]
    assert context_question.shape[-1] == D

    mask_f = atten_mask.astype(jnp.float32).reshape(B, 1, Lk)

    out_shapes = (
        jax.ShapeDtypeStruct((B, Lq, D), jnp.float32),    # outputs
        jax.ShapeDtypeStruct((B, Lq, Lk), jnp.float32),   # attention weights
        jax.ShapeDtypeStruct((B, Lq, 1), jnp.float32),    # pointer switches
    )
    return pl.pallas_call(
        functools.partial(_pointer_decoder_kernel, d_hid=D),
        out_shape=out_shapes,
        grid=(B,),
        in_specs=[
            pl.BlockSpec((1, Lq, D), lambda b: (b, 0, 0)),     # input
            pl.BlockSpec((1, Lk, D), lambda b: (b, 0, 0)),     # context
            pl.BlockSpec((1, 1, Lk), lambda b: (b, 0, 0)),     # mask (unreplicated)
            pl.BlockSpec((2 * D, D), lambda b: (0, 0)),        # W_out^T
            pl.BlockSpec((2 * D, 1), lambda b: (0, 0)),        # W_sw^T
            pl.BlockSpec((1, 1), lambda b: (0, 0)),            # b_sw
        ],
        out_specs=(
            pl.BlockSpec((1, Lq, D), lambda b: (b, 0, 0)),
            pl.BlockSpec((1, Lq, Lk), lambda b: (b, 0, 0)),
            pl.BlockSpec((1, Lq, 1), lambda b: (b, 0, 0)),
        ),
        compiler_params=pltpu.CompilerParams(
            dimension_semantics=("parallel",)),
    )(inp.astype(jnp.float32), context_question.astype(jnp.float32), mask_f,
      params["w_out_t"], params["w_sw_t"], params["b_sw"])


# ----------------------------- pure-JAX reference ----------------------------

def pointer_decoder_reference(params, inp, ctx, atten_mask):
    s = jnp.einsum("bqd,bkd->bqk", inp, ctx)
    s = jnp.where(atten_mask[:, None, :], NEG_INF, s)
    w = jax.nn.softmax(s, axis=-1) + EPSILON
    ctx_att = jnp.einsum("bqk,bkd->bqd", w, ctx)
    out = jnp.tanh(jnp.concatenate([inp, ctx_att], -1) @ params["w_out_t"])
    sw = jax.nn.sigmoid(jnp.concatenate([inp, out], -1) @ params["w_sw_t"]
                        + params["b_sw"])
    return out, w, sw


# ----------------------------------- main ------------------------------------

if __name__ == "__main__":
    B, Lq, Lk = 2, 8, 16
    d_hid = d_in = 32   # module requires d_in == d_hid (see header note)

    key = jax.random.PRNGKey(0)
    k_in, k_ctx, k_wo, k_ws, k_b = jax.random.split(key, 5)
    scale = 0.1
    # Weights stored pre-transposed once (x @ W form), matching
    #   linear_out  = nn.Linear(2*d_hid, d_hid, bias=False)   -> W_out^T (2D, D)
    #   switch lin  = nn.Linear(d_hid + d_in, 1)               -> W_sw^T  (2D, 1), b (1,1)
    params = dict(
        w_out_t=jax.random.normal(k_wo, (2 * d_hid, d_hid), jnp.float32) * scale,
        w_sw_t=jax.random.normal(k_ws, (d_hid + d_in, 1), jnp.float32) * scale,
        b_sw=jax.random.normal(k_b, (1, 1), jnp.float32) * scale,
    )

    inp = jax.random.normal(k_in, (B, Lq, d_hid), jnp.float32)
    ctx = jax.random.normal(k_ctx, (B, Lk, d_hid), jnp.float32)
    # padding-style key mask: True == masked.  Second example pads last 5 keys.
    atten_mask = jnp.zeros((B, Lk), dtype=bool).at[1, Lk - 5:].set(True)

    out, wgt, sw = jax.block_until_ready(
        pointer_decoder_forward(params, inp, ctx, atten_mask))

    assert out.shape == (B, Lq, d_hid)
    assert wgt.shape == (B, Lq, Lk)
    assert sw.shape == (B, Lq, 1)
    assert bool(jnp.all(jnp.isfinite(out)))
    assert bool(jnp.all(jnp.isfinite(wgt)))
    assert bool(jnp.all(jnp.isfinite(sw)))

    out_r, wgt_r, sw_r = pointer_decoder_reference(params, inp, ctx, atten_mask)
    np.testing.assert_allclose(np.asarray(out), np.asarray(out_r), rtol=1e-2, atol=1e-2)
    np.testing.assert_allclose(np.asarray(wgt), np.asarray(wgt_r), rtol=1e-2, atol=1e-2)
    np.testing.assert_allclose(np.asarray(sw), np.asarray(sw_r), rtol=1e-2, atol=1e-2)

    # masked keys receive (near-)zero attention weight (only the +EPSILON)
    assert float(jnp.max(wgt[1, :, Lk - 5:])) <= 2 * EPSILON

    print("KERNEL_OK")
</pallas_src>

<mosaic_0001>
module attributes {stable_mosaic.version = 11 : i64} {
  func.func @_pointer_decoder_kernel(%arg0: i32, %arg1: memref<1x8x32xf32, #tpu.memory_space<vmem>>, %arg2: memref<1x16x32xf32, #tpu.memory_space<vmem>>, %arg3: memref<1x1x16xf32, #tpu.memory_space<vmem>>, %arg4: memref<64x32xf32, #tpu.memory_space<vmem>>, %arg5: memref<64x1xf32, #tpu.memory_space<vmem>>, %arg6: memref<1x1xf32, #tpu.memory_space<vmem>>, %arg7: memref<1x8x32xf32, #tpu.memory_space<vmem>>, %arg8: memref<1x8x16xf32, #tpu.memory_space<vmem>>, %arg9: memref<1x8x1xf32, #tpu.memory_space<vmem>>) attributes {dimension_semantics = [#tpu.dimension_semantics<parallel>], iteration_bounds = array<i64: 2>, scalar_prefetch = 0 : i64, scratch_operands = 0 : i64, tpu.core_type = #tpu.core_type<tc>, window_params = [{transform_indices = @transform_0, window_bounds = array<i64: 1, 8, 32>}, {transform_indices = @transform_1, window_bounds = array<i64: 1, 16, 32>}, {transform_indices = @transform_2, window_bounds = array<i64: 1, 1, 16>}, {pipeline_mode = #tpu.pipeline_mode<synchronous>, transform_indices = @transform_3, window_bounds = array<i64: 64, 32>}, {pipeline_mode = #tpu.pipeline_mode<synchronous>, transform_indices = @transform_4, window_bounds = array<i64: 64, 1>}, {pipeline_mode = #tpu.pipeline_mode<synchronous>, transform_indices = @transform_5, window_bounds = array<i64: 1, 1>}, {transform_indices = @transform_6, window_bounds = array<i64: 1, 8, 32>}, {transform_indices = @transform_7, window_bounds = array<i64: 1, 8, 16>}, {transform_indices = @transform_8, window_bounds = array<i64: 1, 8, 1>}]} {
    %c0 = arith.constant 0 : index
    %c0_0 = arith.constant 0 : index
    %c0_1 = arith.constant 0 : index
    %0 = vector.load %arg1[%c0, %c0_0, %c0_1] : memref<1x8x32xf32, #tpu.memory_space<vmem>>, vector<1x8x32xf32>
    %1 = vector.shape_cast %0 : vector<1x8x32xf32> to vector<8x32xf32>
    %c0_2 = arith.constant 0 : index
    %c0_3 = arith.constant 0 : index
    %c0_4 = arith.constant 0 : index
    %2 = vector.load %arg2[%c0_2, %c0_3, %c0_4] : memref<1x16x32xf32, #tpu.memory_space<vmem>>, vector<1x16x32xf32>
    %3 = vector.shape_cast %2 : vector<1x16x32xf32> to vector<16x32xf32>
    %c0_5 = arith.constant 0 : index
    %c0_6 = arith.constant 0 : index
    %c0_7 = arith.constant 0 : index
    %4 = vector.load %arg3[%c0_5, %c0_6, %c0_7] : memref<1x1x16xf32, #tpu.memory_space<vmem>>, vector<1x1x16xf32>
    %5 = vector.shape_cast %4 : vector<1x1x16xf32> to vector<1x16xf32>
    %6 = tpu.transpose %3, [1, 0] : vector<16x32xf32> -> vector<32x16xf32>
    %cst = arith.constant dense<0.000000e+00> : vector<8x16xf32>
    %7 = tpu.matmul %1, %6, %cst {dimension_numbers = #tpu.dot_dimension_numbers<[1], [0], [0], [1], [0, 0, 1, 1], [], []>} : vector<8x32xf32>, vector<32x16xf32>, vector<8x16xf32> -> vector<8x16xf32>
    %cst_8 = arith.constant 0.000000e+00 : f32
    %8 = vector.broadcast %cst_8 : f32 to vector<1x16xf32>
    %9 = arith.cmpf ogt, %5, %8 : vector<1x16xf32>
    %cst_9 = arith.constant -1.000000e+30 : f32
    %10 = vector.shape_cast %9 : vector<1x16xi1> to vector<1x16xi1>
    %11 = vector.broadcast %10 : vector<1x16xi1> to vector<8x16xi1>
    %12 = vector.broadcast %cst_9 : f32 to vector<8x16xf32>
    %13 = arith.select %11, %12, %7 : vector<8x16xi1>, vector<8x16xf32>
    %cst_10 = arith.constant dense<0xFF800000> : vector<8xf32>
    %14 = vector.multi_reduction <maximumf>, %13, %cst_10 [1] : vector<8x16xf32> to vector<8xf32>
    %15 = vector.shape_cast %14 : vector<8xf32> to vector<8x1xf32>
    %16 = vector.broadcast %15 : vector<8x1xf32> to vector<8x16xf32>
    %17 = arith.subf %13, %16 : vector<8x16xf32>
    %18 = math.exp %17 : vector<8x16xf32>
    %cst_11 = arith.constant dense<0.000000e+00> : vector<8xf32>
    %19 = vector.multi_reduction <add>, %18, %cst_11 [1] : vector<8x16xf32> to vector<8xf32>
    %20 = vector.shape_cast %19 : vector<8xf32> to vector<8x1xf32>
    %21 = tpu.reciprocal %20 {approx = true} : vector<8x1xf32> -> vector<8x1xf32>
    %22 = vector.broadcast %21 : vector<8x1xf32> to vector<8x16xf32>
    %23 = arith.mulf %18, %22 : vector<8x16xf32>
    %cst_12 = arith.constant 1.000000e-10 : f32
    %24 = vector.broadcast %cst_12 : f32 to vector<8x16xf32>
    %25 = arith.addf %23, %24 : vector<8x16xf32>
    %c0_13 = arith.constant 0 : index
    %c0_14 = arith.constant 0 : index
    %c0_15 = arith.constant 0 : index
    %26 = vector.load %arg8[%c0_13, %c0_14, %c0_15] : memref<1x8x16xf32, #tpu.memory_space<vmem>>, vector<1x8x16xf32>
    %27 = vector.shape_cast %26 : vector<1x8x16xf32> to vector<8x16xf32>
    %28 = vector.shape_cast %25 : vector<8x16xf32> to vector<1x8x16xf32>
    tpu.vector_store %arg8[%c0_13, %c0_14, %c0_15], %28 {strides = array<i32>} : memref<1x8x16xf32, #tpu.memory_space<vmem>>, vector<1x8x16xf32>,
    %cst_16 = arith.constant dense<0.000000e+00> : vector<8x32xf32>
    %29 = tpu.matmul %25, %3, %cst_16 {dimension_numbers = #tpu.dot_dimension_numbers<[1], [0], [0], [1], [0, 0, 1, 1], [], []>} : vector<8x16xf32>, vector<16x32xf32>, vector<8x32xf32> -> vector<8x32xf32>
    %c0_17 = arith.constant 0 : index
    %c0_18 = arith.constant 0 : index
    %30 = vector.load %arg4[%c0_17, %c0_18] : memref<64x32xf32, #tpu.memory_space<vmem>>, vector<64x32xf32>
    %31 = vector.extract_strided_slice %30 {offsets = [0, 0], sizes = [32, 32], strides = [1, 1]} : vector<64x32xf32> to vector<32x32xf32>
    %cst_19 = arith.constant dense<0.000000e+00> : vector<8x32xf32>
    %32 = tpu.matmul %1, %31, %cst_19 {dimension_numbers = #tpu.dot_dimension_numbers<[1], [0], [0], [1], [0, 0, 1, 1], [], []>} : vector<8x32xf32>, vector<32x32xf32>, vector<8x32xf32> -> vector<8x32xf32>
    %33 = vector.extract_strided_slice %30 {offsets = [32, 0], sizes = [32, 32], strides = [1, 1]} : vector<64x32xf32> to vector<32x32xf32>
    %cst_20 = arith.constant dense<0.000000e+00> : vector<8x32xf32>
    %34 = tpu.matmul %29, %33, %cst_20 {dimension_numbers = #tpu.dot_dimension_numbers<[1], [0], [0], [1], [0, 0, 1, 1], [], []>} : vector<8x32xf32>, vector<32x32xf32>, vector<8x32xf32> -> vector<8x32xf32>
    %35 = arith.addf %32, %34 : vector<8x32xf32>
    %36 = math.tanh %35 : vector<8x32xf32>
    %c0_21 = arith.constant 0 : index
    %c0_22 = arith.constant 0 : index
    %c0_23 = arith.constant 0 : index
    %37 = vector.load %arg7[%c0_21, %c0_22, %c0_23] : memref<1x8x32xf32, #tpu.memory_space<vmem>>, vector<1x8x32xf32>
    %38 = vector.shape_cast %37 : vector<1x8x32xf32> to vector<8x32xf32>
    %39 = vector.shape_cast %36 : vector<8x32xf32> to vector<1x8x32xf32>
    tpu.vector_store %arg7[%c0_21, %c0_22, %c0_23], %39 {strides = array<i32>} : memref<1x8x32xf32, #tpu.memory_space<vmem>>, vector<1x8x32xf32>,
    %c0_24 = arith.constant 0 : index
    %c0_25 = arith.constant 0 : index
    %40 = vector.load %arg5[%c0_24, %c0_25] : memref<64x1xf32, #tpu.memory_space<vmem>>, vector<64x1xf32>
    %41 = vector.extract_strided_slice %40 {offsets = [0, 0], sizes = [32, 1], strides = [1, 1]} : vector<64x1xf32> to vector<32x1xf32>
    %cst_26 = arith.constant dense<0.000000e+00> : vector<8x1xf32>
    %42 = tpu.matmul %1, %41, %cst_26 {dimension_numbers = #tpu.dot_dimension_numbers<[1], [0], [0], [1], [0, 0, 1, 1], [], []>} : vector<8x32xf32>, vector<32x1xf32>, vector<8x1xf32> -> vector<8x1xf32>
    %43 = vector.extract_strided_slice %40 {offsets = [32, 0], sizes = [32, 1], strides = [1, 1]} : vector<64x1xf32> to vector<32x1xf32>
    %cst_27 = arith.constant dense<0.000000e+00> : vector<8x1xf32>
    %44 = tpu.matmul %36, %43, %cst_27 {dimension_numbers = #tpu.dot_dimension_numbers<[1], [0], [0], [1], [0, 0, 1, 1], [], []>} : vector<8x32xf32>, vector<32x1xf32>, vector<8x1xf32> -> vector<8x1xf32>
    %45 = arith.addf %42, %44 : vector<8x1xf32>
    %c0_28 = arith.constant 0 : index
    %c0_29 = arith.constant 0 : index
    %46 = vector.load %arg6[%c0_28, %c0_29] : memref<1x1xf32, #tpu.memory_space<vmem>>, vector<1x1xf32>
    %47 = vector.broadcast %46 : vector<1x1xf32> to vector<8x1xf32>
    %48 = arith.addf %45, %47 : vector<8x1xf32>
    %49 = arith.negf %48 : vector<8x1xf32>
    %50 = math.exp %49 : vector<8x1xf32>
    %cst_30 = arith.constant 1.000000e+00 : f32
    %51 = vector.broadcast %cst_30 : f32 to vector<8x1xf32>
    %52 = arith.addf %51, %50 : vector<8x1xf32>
    %53 = arith.divf %51, %52 : vector<8x1xf32>
    %c0_31 = arith.constant 0 : index
    %c0_32 = arith.constant 0 : index
    %c0_33 = arith.constant 0 : index
    %54 = vector.load %arg9[%c0_31, %c0_32, %c0_33] : memref<1x8x1xf32, #tpu.memory_space<vmem>>, vector<1x8x1xf32>
    %55 = vector.shape_cast %54 : vector<1x8x1xf32> to vector<8x1xf32>
    %56 = vector.shape_cast %53 : vector<8x1xf32> to vector<1x8x1xf32>
    tpu.vector_store %arg9[%c0_31, %c0_32, %c0_33], %56 {strides = array<i32>} : memref<1x8x1xf32, #tpu.memory_space<vmem>>, vector<1x8x1xf32>,
    return
  }
  func.func @transform_0(%arg0: i32) -> (i32, i32, i32) {
    %c0_i32 = arith.constant 0 : i32
    %c0_i32_0 = arith.constant 0 : i32
    %c0_i32_1 = arith.constant 0 : i32
    return %arg0, %c0_i32, %c0_i32_0 : i32, i32, i32
  }
  func.func @transform_1(%arg0: i32) -> (i32, i32, i32) {
    %c0_i32 = arith.constant 0 : i32
    %c0_i32_0 = arith.constant 0 : i32
    %c0_i32_1 = arith.constant 0 : i32
    return %arg0, %c0_i32, %c0_i32_0 : i32, i32, i32
  }
  func.func @transform_2(%arg0: i32) -> (i32, i32, i32) {
    %c0_i32 = arith.constant 0 : i32
    %c0_i32_0 = arith.constant 0 : i32
    %c0_i32_1 = arith.constant 0 : i32
    return %arg0, %c0_i32, %c0_i32_0 : i32, i32, i32
  }
  func.func @transform_3(%arg0: i32) -> (i32, i32) {
    %c0_i32 = arith.constant 0 : i32
    %c0_i32_0 = arith.constant 0 : i32
    %c0_i32_1 = arith.constant 0 : i32
    return %c0_i32, %c0_i32_0 : i32, i32
  }
  func.func @transform_4(%arg0: i32) -> (i32, i32) {
    %c0_i32 = arith.constant 0 : i32
    %c0_i32_0 = arith.constant 0 : i32
    %c0_i32_1 = arith.constant 0 : i32
    return %c0_i32, %c0_i32_0 : i32, i32
  }
  func.func @transform_5(%arg0: i32) -> (i32, i32) {
    %c0_i32 = arith.constant 0 : i32
    %c0_i32_0 = arith.constant 0 : i32
    %c0_i32_1 = arith.constant 0 : i32
    return %c0_i32, %c0_i32_0 : i32, i32
  }
  func.func @transform_6(%arg0: i32) -> (i32, i32, i32) {
    %c0_i32 = arith.constant 0 : i32
    %c0_i32_0 = arith.constant 0 : i32
    %c0_i32_1 = arith.constant 0 : i32
    return %arg0, %c0_i32, %c0_i32_0 : i32, i32, i32
  }
  func.func @transform_7(%arg0: i32) -> (i32, i32, i32) {
    %c0_i32 = arith.constant 0 : i32
    %c0_i32_0 = arith.constant 0 : i32
    %c0_i32_1 = arith.constant 0 : i32
    return %arg0, %c0_i32, %c0_i32_0 : i32, i32, i32
  }
  func.func @transform_8(%arg0: i32) -> (i32, i32, i32) {
    %c0_i32 = arith.constant 0 : i32
    %c0_i32_0 = arith.constant 0 : i32
    %c0_i32_1 = arith.constant 0 : i32
    return %arg0, %c0_i32, %c0_i32_0 : i32, i32, i32
  }
}

</mosaic_0001>

<llo_original>
// kernel: tpu_custom_call.1
$region0: #{tpu_custom_call.1}
  #allocation0 [shape = 'u32[]', space=smem, size = 0x4, offset = 0x4, fixed_abs, tag = 'smem constant byte address 0x4 - core index']
  #allocation1 [shape = 'u32[144,128]{1,0:T(1,128)}', space=vmem, size = 0x12000, scoped, tag = 'internal scratch']
  #allocation2 [shape = 'f32[1,1]{1,0:T(1,128)S(1)}', space=vmem, size = 0x200, scoped, tag = 'scoped memory for tpu_custom_call.1']
  %s0 = inlined_call_operand.vmem [shape: f32[2,8,32], index: 0, kind: input, shape index: {}]
  %s1 = inlined_call_operand.vmem [shape: f32[2,16,32], index: 1, kind: input, shape index: {}]
  %s2 = inlined_call_operand.vmem [shape: f32[2,1,16], index: 2, kind: input, shape index: {}]
  %s3 = inlined_call_operand.vmem [shape: f32[64,32], index: 3, kind: input, shape index: {}]
  %s4 = inlined_call_operand.vmem [shape: f32[64,1], index: 4, kind: input, shape index: {}]
  %s5 = inlined_call_operand.<no memory space> [shape: f32[1,1], index: 5, kind: input, shape index: {}]
  %s6 = inlined_call_operand.hbm [shape: f32[2,8,32], index: 6, kind: output, shape index: {0}]
  %s7 = inlined_call_operand.hbm [shape: f32[2,8,16], index: 7, kind: output, shape index: {1}]
  %s8 = inlined_call_operand.vmem [shape: f32[2,8,1], index: 8, kind: output, shape index: {2}]
  %9 = xla_tuple %s6, %s7, %s8
  %s10 = sld [smem:[#allocation0]]
  $region73: #{tpu_custom_call.1} parent=0
    _
  %s12 = ssub.s32 1, %s10
  %s13 = scalar_select 0, %s12, %s10
  %v14 = vstv %s5
  %15 = vst [vmem:[#allocation2] sm:$0x1] %v14
  $region1: #{tpu_custom_call.1} parent=0
    #allocation3 [shape = 'u8[8192]{0}', space=vmem, size = 0x2000, scoped, tag = 'output window, operand 0']
    #allocation4 [shape = 's32[2]{0}', space=sflag, size = 0x8, scoped, tag = 'scoped memory for tpu_custom_call.1']
    #allocation5 [shape = 'u8[8192]{0}', space=vmem, size = 0x2000, scoped, tag = 'output window, operand 1']
    #allocation6 [shape = 's32[2]{0}', space=sflag, size = 0x8, scoped, tag = 'scoped memory for tpu_custom_call.1']
    %16 = vsyncpa [#allocation4], 0
    %s17 = scalar_lea.sflag [#allocation4], 1
    %18 = vsyncpa %s17, 0
    %19 = vsyncpa [#allocation6], 0
    %s20 = scalar_lea.sflag [#allocation6], 1
    %21 = vsyncpa %s20, 0
    loop: start=0, step=1, limit=4
    $region2: #{tpu_custom_call.1} parent=1 // loop_pre_header
      _
    $region3: #{tpu_custom_call.1} parent=1 // loop_header
      %s23 = sphi 0, %s27
      %p24 = scmp.ge.s32.totalorder %s23, 4
      %s33 = sphi 0, %s35
      %s36 = sphi 0, %s33
      %s37 = sphi 0, %s36
      %s53 = sphi 0, %s37
      %s59 = sphi 0, %s61
      %s62 = sphi 0, %s59
      %s63 = sphi 0, %s62
      %s79 = sphi 0, %s63
      %s85 = sphi 0, %s87
      %s88 = sphi 0, %s85
      %s89 = sphi 0, %s88
      %s105 = sphi 0, %s89
      %s109 = sphi 0, %s109
      %s111 = sphi 0, %s109
      %s112 = sphi 0, %s111
      %s126 = sphi 0, %s112
      %s130 = sphi 0, %s130
      %s132 = sphi 0, %s130
      %s133 = sphi 0, %s132
      %s147 = sphi 0, %s133
      %s151 = sphi 0, %s151
      %s153 = sphi 0, %s151
      %s154 = sphi 0, %s153
      %s168 = sphi 0, %s154
      %s174 = sphi 0, %s176
      %s177 = sphi 0, %s174
      %s178 = sphi 0, %s177
      %s194 = sphi 0, %s178
      %s200 = sphi 0, %s202
      %s203 = sphi 0, %s200
      %s204 = sphi 0, %s203
      %s220 = sphi 0, %s204
      %s226 = sphi 0, %s228
      %s229 = sphi 0, %s226
      %s230 = sphi 0, %s229
      %s246 = sphi 0, %s230
    $region4: #{tpu_custom_call.1} parent=1 // loop_header_branch
      %26 = sbr.rel (%p24) target = $region8
    $region5: #{tpu_custom_call.1} parent=1 // loop_body
      %s28 = ssub.s32 %s23, 1
      %s29 = ssub.s32 %s23, 2
      %s30 = sadd.s32 %s23, 1
      %s31 = ssub.s32 %s23, %s30
      %p32 = scmp.eq.s32.totalorder %s31, 0
      %s34 = sadd.s32 %s33, 1
      %s35 = scalar_select %p32, %s33, %s34
      %p38 = pneg %p32
      %p39 = scmp.eq.s32.totalorder %s23, 1
      %p40 = por %p38, %p39
      %p41 = scmp.ne.s32.totalorder %s33, %s36
      %p42 = scmp.eq.s32.totalorder %s23, 0
      %p43 = por %p41, %p42
      %p44 = scmp.ne.s32.totalorder %s33, %s36
      %p45 = scmp.eq.s32.totalorder %s28, 1
      %p46 = por %p44, %p45
      %p47 = scmp.ne.s32.totalorder %s36, %s37
      %p48 = scmp.eq.s32.totalorder %s28, 0
      %p49 = por %p47, %p48
      %p50 = scmp.ne.s32.totalorder %s36, %s37
      %p51 = scmp.eq.s32.totalorder %s29, 1
      %p52 = por %p50, %p51
      %p54 = scmp.ne.s32.totalorder %s37, %s53
      %p55 = scmp.eq.s32.totalorder %s29, 0
      %p56 = por %p54, %p55
      %s57 = ssub.s32 %s23, %s30
      %p58 = scmp.eq.s32.totalorder %s57, 0
      %s60 = sadd.s32 %s59, 1
      %s61 = scalar_select %p58, %s59, %s60
      %p64 = pneg %p58
      %p65 = scmp.eq.s32.totalorder %s23, 1
      %p66 = por %p64, %p65
      %p67 = scmp.ne.s32.totalorder %s59, %s62
      %p68 = scmp.eq.s32.totalorder %s23, 0
      %p69 = por %p67, %p68
      %p70 = scmp.ne.s32.totalorder %s59, %s62
      %p71 = scmp.eq.s32.totalorder %s28, 1
      %p72 = por %p70, %p71
      %p73 = scmp.ne.s32.totalorder %s62, %s63
      %p74 = scmp.eq.s32.totalorder %s28, 0
      %p75 = por %p73, %p74
      %p76 = scmp.ne.s32.totalorder %s62, %s63
      %p77 = scmp.eq.s32.totalorder %s29, 1
      %p78 = por %p76, %p77
      %p80 = scmp.ne.s32.totalorder %s63, %s79
      %p81 = scmp.eq.s32.totalorder %s29, 0
      %p82 = por %p80, %p81
      %s83 = ssub.s32 %s23, %s30
      %p84 = scmp.eq.s32.totalorder %s83, 0
      %s86 = sadd.s32 %s85, 1
      %s87 = scalar_select %p84, %s85, %s86
      %p90 = pneg %p84
      %p91 = scmp.eq.s32.totalorder %s23, 1
      %p92 = por %p90, %p91
      %p93 = scmp.ne.s32.totalorder %s85, %s88
      %p94 = scmp.eq.s32.totalorder %s23, 0
      %p95 = por %p93, %p94
      %p96 = scmp.ne.s32.totalorder %s85, %s88
      %p97 = scmp.eq.s32.totalorder %s28, 1
      %p98 = por %p96, %p97
      %p99 = scmp.ne.s32.totalorder %s88, %s89
      %p100 = scmp.eq.s32.totalorder %s28, 0
      %p101 = por %p99, %p100
      %p102 = scmp.ne.s32.totalorder %s88, %s89
      %p103 = scmp.eq.s32.totalorder %s29, 1
      %p104 = por %p102, %p103
      %p106 = scmp.ne.s32.totalorder %s89, %s105
      %p107 = scmp.eq.s32.totalorder %s29, 0
      %p108 = por %p106, %p107
      %s110 = sadd.s32 %s109, 1
      %p113 = scmp.eq.s32.totalorder %s23, 1
      %p114 = scmp.ne.s32.totalorder %s109, %s111
      %p115 = scmp.eq.s32.totalorder %s23, 0
      %p116 = por %p114, %p115
      %p117 = scmp.ne.s32.totalorder %s109, %s111
      %p118 = scmp.eq.s32.totalorder %s28, 1
      %p119 = por %p117, %p118
      %p120 = scmp.ne.s32.totalorder %s111, %s112
      %p121 = scmp.eq.s32.totalorder %s28, 0
      %p122 = por %p120, %p121
      %p123 = scmp.ne.s32.totalorder %s111, %s112
      %p124 = scmp.eq.s32.totalorder %s29, 1
      %p125 = por %p123, %p124
      %p127 = scmp.ne.s32.totalorder %s112, %s126
      %p128 = scmp.eq.s32.totalorder %s29, 0
      %p129 = por %p127, %p128
      %s131 = sadd.s32 %s130, 1
      %p134 = scmp.eq.s32.totalorder %s23, 1
      %p135 = scmp.ne.s32.totalorder %s130, %s132
      %p136 = scmp.eq.s32.totalorder %s23, 0
      %p137 = por %p135, %p136
      %p138 = scmp.ne.s32.totalorder %s130, %s132
      %p139 = scmp.eq.s32.totalorder %s28, 1
      %p140 = por %p138, %p139
      %p141 = scmp.ne.s32.totalorder %s132, %s133
      %p142 = scmp.eq.s32.totalorder %s28, 0
      %p143 = por %p141, %p142
      %p144 = scmp.ne.s32.totalorder %s132, %s133
      %p145 = scmp.eq.s32.totalorder %s29, 1
      %p146 = por %p144, %p145
      %p148 = scmp.ne.s32.totalorder %s133, %s147
      %p149 = scmp.eq.s32.totalorder %s29, 0
      %p150 = por %p148, %p149
      %s152 = sadd.s32 %s151, 1
      %p155 = scmp.eq.s32.totalorder %s23, 1
      %p156 = scmp.ne.s32.totalorder %s151, %s153
      %p157 = scmp.eq.s32.totalorder %s23, 0
      %p158 = por %p156, %p157
      %p159 = scmp.ne.s32.totalorder %s151, %s153
      %p160 = scmp.eq.s32.totalorder %s28, 1
      %p161 = por %p159, %p160
      %p162 = scmp.ne.s32.totalorder %s153, %s154
      %p163 = scmp.eq.s32.totalorder %s28, 0
      %p164 = por %p162, %p163
      %p165 = scmp.ne.s32.totalorder %s153, %s154
      %p166 = scmp.eq.s32.totalorder %s29, 1
      %p167 = por %p165, %p166
      %p169 = scmp.ne.s32.totalorder %s154, %s168
      %p170 = scmp.eq.s32.totalorder %s29, 0
      %p171 = por %p169, %p170
      %s172 = ssub.s32 %s23, %s30
      %p173 = scmp.eq.s32.totalorder %s172, 0
      %s175 = sadd.s32 %s174, 1
      %s176 = scalar_select %p173, %s174, %s175
      %p179 = pneg %p173
      %p180 = scmp.eq.s32.totalorder %s23, 1
      %p181 = por %p179, %p180
      %p182 = scmp.ne.s32.totalorder %s174, %s177
      %p183 = scmp.eq.s32.totalorder %s23, 0
      %p184 = por %p182, %p183
      %p185 = scmp.ne.s32.totalorder %s174, %s177
      %p186 = scmp.eq.s32.totalorder %s28, 1
      %p187 = por %p185, %p186
      %p188 = scmp.ne.s32.totalorder %s177, %s178
      %p189 = scmp.eq.s32.totalorder %s28, 0
      %p190 = por %p188, %p189
      %p191 = scmp.ne.s32.totalorder %s177, %s178
      %p192 = scmp.eq.s32.totalorder %s29, 1
      %p193 = por %p191, %p192
      %p195 = scmp.ne.s32.totalorder %s178, %s194
      %p196 = scmp.eq.s32.totalorder %s29, 0
      %p197 = por %p195, %p196
      %s198 = ssub.s32 %s23, %s30
      %p199 = scmp.eq.s32.totalorder %s198, 0
      %s201 = sadd.s32 %s200, 1
      %s202 = scalar_select %p199, %s200, %s201
      %p205 = pneg %p199
      %p206 = scmp.eq.s32.totalorder %s23, 1
      %p207 = por %p205, %p206
      %p208 = scmp.ne.s32.totalorder %s200, %s203
      %p209 = scmp.eq.s32.totalorder %s23, 0
      %p210 = por %p208, %p209
      %p211 = scmp.ne.s32.totalorder %s200, %s203
      %p212 = scmp.eq.s32.totalorder %s28, 1
      %p213 = por %p211, %p212
      %p214 = scmp.ne.s32.totalorder %s203, %s204
      %p215 = scmp.eq.s32.totalorder %s28, 0
      %p216 = por %p214, %p215
      %p217 = scmp.ne.s32.totalorder %s203, %s204
      %p218 = scmp.eq.s32.totalorder %s29, 1
      %p219 = por %p217, %p218
      %p221 = scmp.ne.s32.totalorder %s204, %s220
      %p222 = scmp.eq.s32.totalorder %s29, 0
      %p223 = por %p221, %p222
      %s224 = ssub.s32 %s23, %s30
      %p225 = scmp.eq.s32.totalorder %s224, 0
      %s227 = sadd.s32 %s226, 1
      %s228 = scalar_select %p225, %s226, %s227
      %p231 = pneg %p225
      %p232 = scmp.eq.s32.totalorder %s23, 1
      %p233 = por %p231, %p232
      %p234 = scmp.ne.s32.totalorder %s226, %s229
      %p235 = scmp.eq.s32.totalorder %s23, 0
      %p236 = por %p234, %p235
      %p237 = scmp.ne.s32.totalorder %s226, %s229
      %p238 = scmp.eq.s32.totalorder %s28, 1
      %p239 = por %p237, %p238
      %p240 = scmp.ne.s32.totalorder %s229, %s230
      %p241 = scmp.eq.s32.totalorder %s28, 0
      %p242 = por %p240, %p241
      %p243 = scmp.ne.s32.totalorder %s229, %s230
      %p244 = scmp.eq.s32.totalorder %s29, 1
      %p245 = por %p243, %p244
      %p247 = scmp.ne.s32.totalorder %s230, %s246
      %p248 = scmp.eq.s32.totalorder %s29, 0
      %p249 = por %p247, %p248
      %p250 = scmp.le.s32.totalorder 1, %s23
      %p251 = scmp.lt.s32.totalorder %s23, 3
      %p252 = pnand %p250, %p251
      %p253 = pneg %p252
      // Predicated region
      $region9: #{tpu_custom_call.1} parent=5 // pred_check
        _
      $region10: #{tpu_custom_call.1} parent=5 // pred_check_branch
        %255 = sbr.rel (%p252) target = $region12
      $region11: #{tpu_custom_call.1} parent=5 // pred_region
        %s256 = ssub.s32 %s23, 1
        // Predicated region
        $region13: #{tpu_custom_call.1} parent=11 // pred_check
          %p257 = pneg %p122
        $region14: #{tpu_custom_call.1} parent=11 // pred_check_branch
          %259 = sbr.rel (%p257) target = $region16
        $region15: #{tpu_custom_call.1} parent=11 // pred_region
          _
        $region16: #{tpu_custom_call.1} parent=11 // pred_fallthru
          _
        // Predicated region
        $region17: #{tpu_custom_call.1} parent=11 // pred_check
          %p260 = pneg %p143
        $region18: #{tpu_custom_call.1} parent=11 // pred_check_branch
          %262 = sbr.rel (%p260) target = $region20
        $region19: #{tpu_custom_call.1} parent=11 // pred_region
          _
        $region20: #{tpu_custom_call.1} parent=11 // pred_fallthru
          _
        // Predicated region
        $region21: #{tpu_custom_call.1} parent=11 // pred_check
          %p263 = pneg %p164
        $region22: #{tpu_custom_call.1} parent=11 // pred_check_branch
          %265 = sbr.rel (%p263) target = $region24
        $region23: #{tpu_custom_call.1} parent=11 // pred_region
          _
        $region24: #{tpu_custom_call.1} parent=11 // pred_fallthru
          _
      $region12: #{tpu_custom_call.1} parent=5 // pred_fallthru
        _
      %p266 = scmp.lt.s32.totalorder %s23, 2
      // Predicated region
      $region25: #{tpu_custom_call.1} parent=5 // pred_check
        %p267 = pneg %p266
      $region26: #{tpu_custom_call.1} parent=5 // pred_check_branch
        %269 = sbr.rel (%p267) target = $region28
      $region27: #{tpu_custom_call.1} parent=5 // pred_region
        // Predicated region
        $region29: #{tpu_custom_call.1} parent=27 // pred_check
          %p270 = pneg %p43
        $region30: #{tpu_custom_call.1} parent=27 // pred_check_branch
          %272 = sbr.rel (%p270) target = $region32
        $region31: #{tpu_custom_call.1} parent=27 // pred_region
          %p273 = scmp.lt.s32.totalorder %s23, 1
          %s274 = scalar_select %p273, %s23, 1
          %s275 = smul.addr %s274, 8
          %s276 = scalar_lea.vmem %s0, %s275
        $region32: #{tpu_custom_call.1} parent=27 // pred_fallthru
          _
        // Predicated region
        $region33: #{tpu_custom_call.1} parent=27 // pred_check
          %p277 = pneg %p69
        $region34: #{tpu_custom_call.1} parent=27 // pred_check_branch
          %279 = sbr.rel (%p277) target = $region36
        $region35: #{tpu_custom_call.1} parent=27 // pred_region
          %p280 = scmp.lt.s32.totalorder %s23, 1
          %s281 = scalar_select %p280, %s23, 1
          %s282 = smul.addr %s281, 2
          %s283 = smul.addr %s282, 8
          %s284 = scalar_lea.vmem %s1, %s283
        $region36: #{tpu_custom_call.1} parent=27 // pred_fallthru
          _
        // Predicated region
        $region37: #{tpu_custom_call.1} parent=27 // pred_check
          %p285 = pneg %p95
        $region38: #{tpu_custom_call.1} parent=27 // pred_check_branch
          %287 = sbr.rel (%p285) target = $region40
        $region39: #{tpu_custom_call.1} parent=27 // pred_region
          %p288 = scmp.lt.s32.totalorder %s23, 1
          %s289 = scalar_select %p288, %s23, 1
          %s290 = scalar_lea.vmem %s2, %s289
        $region40: #{tpu_custom_call.1} parent=27 // pred_fallthru
          _
      $region28: #{tpu_custom_call.1} parent=5 // pred_fallthru
        _
      %p291 = scmp.le.s32.totalorder 1, %s23
      %p292 = scmp.lt.s32.totalorder %s23, 3
      %p293 = pnand %p291, %p292
      %p294 = pneg %p293
      // Predicated region
      $region41: #{tpu_custom_call.1} parent=5 // pred_check
        _
      $region42: #{tpu_custom_call.1} parent=5 // pred_check_branch
        %296 = sbr.rel (%p293) target = $region44
      $region43: #{tpu_custom_call.1} parent=5 // pred_region
        %s297 = ssub.s32 %s23, 1
        %p298 = scmp.lt.s32.totalorder %s28, 1
        %s299 = scalar_select %p298, %s28, 1
        %s300 = smul.addr %s299, 8
        %s301 = scalar_lea.vmem %s0, %s300
        %p302 = pneg %p49
        %p303 = pneg %p46
        %p304 = scmp.lt.s32.totalorder %s28, 1
        %s305 = scalar_select %p304, %s28, 1
        %s306 = smul.addr %s305, 2
        %s307 = smul.addr %s306, 8
        %s308 = scalar_lea.vmem %s1, %s307
        %p309 = pneg %p75
        %p310 = pneg %p72
        %p311 = scmp.lt.s32.totalorder %s28, 1
        %s312 = scalar_select %p311, %s28, 1
        %s313 = scalar_lea.vmem %s2, %s312
        %p314 = pneg %p101
        %p315 = pneg %p98
        %p316 = pneg %p122
        %p317 = pneg %p119
        %p318 = pneg %p143
        %p319 = pneg %p140
        %p320 = pneg %p164
        %p321 = pneg %p161
        %p322 = pneg %p190
        %p323 = pneg %p187
        %s324 = sand.u32 %s177, 1
        %s325 = scalar_lea.sflag [#allocation4], %s324
        %s326 = sand.u32 %s177, 1
        %s327 = smul.addr %s326, 8
        %s328 = scalar_lea.vmem [#allocation3], %s327
        %p329 = pneg %p216
        %p330 = pneg %p213
        %s331 = sand.u32 %s203, 1
        %s332 = scalar_lea.sflag [#allocation6], %s331
        %s333 = sand.u32 %s203, 1
        %s334 = smul.addr %s333, 8
        %s335 = scalar_lea.vmem [#allocation5], %s334
        %p336 = pneg %p242
        %p337 = pneg %p239
        %p338 = scmp.lt.s32.totalorder %s28, 1
        %s339 = scalar_select %p338, %s28, 1
        %s340 = smul.addr %s339, 8
        %s341 = scalar_lea.vmem %s8, %s340
        %p342 = scmp.lt.s32.totalorder %s28, 1
        %s343 = scalar_select %p342, %s28, 1
        %s344 = smul.addr %s343, 8
        %s345 = scalar_lea.vmem %s0, %s344
        %p346 = scmp.lt.s32.totalorder %s28, 1
        %s347 = scalar_select %p346, %s28, 1
        %s348 = smul.addr %s347, 2
        %s349 = smul.addr %s348, 8
        %s350 = scalar_lea.vmem %s1, %s349
        %p351 = scmp.lt.s32.totalorder %s28, 1
        %s352 = scalar_select %p351, %s28, 1
        %s353 = scalar_lea.vmem %s2, %s352
        %p354 = scmp.lt.s32.totalorder %s28, 1
        %s355 = scalar_select %p354, %s28, 1
        %s356 = smul.addr %s355, 8
        %s357 = scalar_lea.vmem %s8, %s356
        %v358 = vld [vmem:[%s345] sm:$0xff]
        %v359 = vld [vmem:[%s350] sm:$0xff]
        %v360 = vld [vmem:[%s350 + $0x8] sm:$0xff]
        %v361 = vld [vmem:[%s353] sm:$0x1]
        %vm362 = vcmask 261120
        %v364 = vsel %vm362, %v358, 0
        %v367 = vsel %vm362, %v359, 0
        %v370 = vsel %vm362, %v360, 0
        %372 = vmatprep.subr.mxu0 0.0
        %373 = vmatpush1.xpose.msra.mxu0 %v367
        %374 = vmatprep.subr.mxu0 0.0
        %375 = vmatpush1.xpose.msra.mxu0 %v370
        %376 = vmatprep.subr.mxu0 0.0
        %377 = vmatpush1.xpose.msra.mxu0 0.0
        %378 = vmatprep.subr.mxu0 0.0
        %379 = vmatpush1.xpose.msra.mxu0 0.0
        %380 = vmatprep.subr.mxu0 0.0
        %381 = vmatpush1.xpose.msra.mxu0 0.0
        %382 = vmatprep.subr.mxu0 0.0
        %383 = vmatpush1.xpose.msra.mxu0 0.0
        %384 = vmatprep.subr.mxu0 0.0
        %385 = vmatpush1.xpose.msra.mxu0 0.0
        %386 = vmatprep.subr.mxu0 0.0
        %387 = vmatpush1.xpose.msra.mxu0 0.0
        %388 = vmatprep.subr.mxu0 0.0
        %389 = vmatpush1.xpose.msra.mxu0 0.0
        %390 = vmatprep.subr.mxu0 0.0
        %391 = vmatpush1.xpose.msra.mxu0 0.0
        %392 = vmatprep.subr.mxu0 0.0
        %393 = vmatpush1.xpose.msra.mxu0 0.0
        %394 = vmatprep.subr.mxu0 0.0
        %395 = vmatpush1.xpose.msra.mxu0 0.0
        %396 = vmatprep.subr.mxu0 0.0
        %397 = vmatpush1.xpose.msra.mxu0 0.0
        %398 = vmatprep.subr.mxu0 0.0
        %399 = vmatpush1.xpose.msra.mxu0 0.0
        %400 = vmatprep.subr.mxu0 0.0
        %401 = vmatpush1.xpose.msra.mxu0 0.0
        %402 = vmatprep.subr.mxu0 0.0
        %403 = vmatpush1.xpose.msra.mxu0 0.0
        %404 = vmatprep.subr.mxu0 0.0
        %405 = vmatpush1.xpose.msra.mxu0 0.0
        %406 = vmatprep.subr.mxu0 0.0
        %407 = vmatpush1.xpose.msra.mxu0 0.0
        %408 = vmatprep.subr.mxu0 0.0
        %409 = vmatpush1.xpose.msra.mxu0 0.0
        %410 = vmatprep.subr.mxu0 0.0
        %411 = vmatpush1.xpose.msra.mxu0 0.0
        %412 = vmatprep.subr.mxu0 0.0
        %413 = vmatpush1.xpose.msra.mxu0 0.0
        %414 = vmatprep.subr.mxu0 0.0
        %415 = vmatpush1.xpose.msra.mxu0 0.0
        %416 = vmatprep.subr.mxu0 0.0
        %417 = vmatpush1.xpose.msra.mxu0 0.0
        %418 = vmatprep.subr.mxu0 0.0
        %419 = vmatpush1.xpose.msra.mxu0 0.0
        %420 = vmatprep.subr.mxu0 0.0
        %421 = vmatpush1.xpose.msra.mxu0 0.0
        %422 = vmatprep.subr.mxu0 0.0
        %423 = vmatpush1.xpose.msra.mxu0 0.0
        %424 = vmatprep.subr.mxu0 0.0
        %425 = vmatpush1.xpose.msra.mxu0 0.0
        %426 = vmatprep.subr.mxu0 0.0
        %427 = vmatpush1.xpose.msra.mxu0 0.0
        %428 = vmatprep.subr.mxu0 0.0
        %429 = vmatpush1.xpose.msra.mxu0 0.0
        %430 = vmatprep.subr.mxu0 0.0
        %431 = vmatpush1.xpose.msra.mxu0 0.0
        %432 = vmatprep.subr.mxu0 0.0
        %433 = vmatpush1.xpose.msra.mxu0 0.0
        %434 = vmatprep.subr.mxu0 0.0
        %435 = vmatpush1.xpose.msra.mxu0 0.0
        %436 = vmatprep.mubr.f32.mxu0 0.0
        %437 = vmatmul.mubr.f32.gmra.mrb[0].mxu0 %v364
        %v438 = vpop.f32.mrb[0].mxu0
        %v439 = vadd.f32 0.0, %v438
        %v440 = vpop.f32.mrb[0].mxu0
        %441 = vdwg.mxu0
        %vm442 = vcmp.gt.f32.partialorder %v361, 0.0
        %v443 = vsel %vm442, 1, 0
        %v444 = vlaneseq
        %v445 = vshrl.u32 %v444, 7
        %v446 = vsub.s32 0, %v445
        %v447 = vrot.slane %v443, %v446
        %vm448 = vcmp.eq.s32.totalorder %v447, 1
        %v449 = vsel %vm448, -1e+30, %v439
        %vm450 = vcmask 130048
        %v451 = vsel %vm450, %v449, -inf
        %452 = vmax.xlane.f32.xlu0 %v451
        %v453 = vpop.xlane.xlu0 %452
        %v454 = vsub.f32 %v449, %v453
        %v455 = vmul.f32 %v454, 1.442695
        %v456 = vpow.pop %v455
        %v457 = vsel %vm450, %v456, 0.0
        %458 = vadd.xlane.f32.xlu0 %v457
        %v459 = vpop.xlane.xlu0 %458
        %v460 = vrcp.pop %v459
        %v461 = vmul.f32 %v456, %v460
        %v462 = vadd.f32 %v461, 1e-10
        %463 = vst.msk [vmem:[%s335] sm:$0xff] %vm450, %v462
        %v465 = vsel %vm450, %v462, 0
        %467 = vmatprep.subr.mxu0 0.0
        %468 = vmatpush1.msra.mxu0 %v359
        %469 = vmatprep.subr.mxu0 0.0
        %470 = vmatpush1.msra.mxu0 %v360
        %471 = vmatprep.subr.mxu0 0.0
        %472 = vmatpush1.msra.mxu0 0.0
        %473 = vmatprep.subr.mxu0 0.0
        %474 = vmatpush1.msra.mxu0 0.0
        %475 = vmatprep.subr.mxu0 0.0
        %476 = vmatpush1.msra.mxu0 0.0
        %477 = vmatprep.subr.mxu0 0.0
        %478 = vmatpush1.msra.mxu0 0.0
        %479 = vmatprep.subr.mxu0 0.0
        %480 = vmatpush1.msra.mxu0 0.0
        %481 = vmatprep.subr.mxu0 0.0
        %482 = vmatpush1.msra.mxu0 0.0
        %483 = vmatprep.subr.mxu0 0.0
        %484 = vmatpush1.msra.mxu0 0.0
        %485 = vmatprep.subr.mxu0 0.0
        %486 = vmatpush1.msra.mxu0 0.0
        %487 = vmatprep.subr.mxu0 0.0
        %488 = vmatpush1.msra.mxu0 0.0
        %489 = vmatprep.subr.mxu0 0.0
        %490 = vmatpush1.msra.mxu0 0.0
        %491 = vmatprep.subr.mxu0 0.0
        %492 = vmatpush1.msra.mxu0 0.0
        %493 = vmatprep.subr.mxu0 0.0
        %494 = vmatpush1.msra.mxu0 0.0
        %495 = vmatprep.subr.mxu0 0.0
        %496 = vmatpush1.msra.mxu0 0.0
        %497 = vmatprep.subr.mxu0 0.0
        %498 = vmatpush1.msra.mxu0 0.0
        %499 = vmatprep.subr.mxu0 0.0
        %500 = vmatpush1.msra.mxu0 0.0
        %501 = vmatprep.subr.mxu0 0.0
        %502 = vmatpush1.msra.mxu0 0.0
        %503 = vmatprep.subr.mxu0 0.0
        %504 = vmatpush1.msra.mxu0 0.0
        %505 = vmatprep.subr.mxu0 0.0
        %506 = vmatpush1.msra.mxu0 0.0
        %507 = vmatprep.subr.mxu0 0.0
        %508 = vmatpush1.msra.mxu0 0.0
        %509 = vmatprep.subr.mxu0 0.0
        %510 = vmatpush1.msra.mxu0 0.0
        %511 = vmatprep.subr.mxu0 0.0
        %512 = vmatpush1.msra.mxu0 0.0
        %513 = vmatprep.subr.mxu0 0.0
        %514 = vmatpush1.msra.mxu0 0.0
        %515 = vmatprep.subr.mxu0 0.0
        %516 = vmatpush1.msra.mxu0 0.0
        %517 = vmatprep.subr.mxu0 0.0
        %518 = vmatpush1.msra.mxu0 0.0
        %519 = vmatprep.subr.mxu0 0.0
        %520 = vmatpush1.msra.mxu0 0.0
        %521 = vmatprep.subr.mxu0 0.0
        %522 = vmatpush1.msra.mxu0 0.0
        %523 = vmatprep.subr.mxu0 0.0
        %524 = vmatpush1.msra.mxu0 0.0
        %525 = vmatprep.subr.mxu0 0.0
        %526 = vmatpush1.msra.mxu0 0.0
        %527 = vmatprep.subr.mxu0 0.0
        %528 = vmatpush1.msra.mxu0 0.0
        %529 = vmatprep.subr.mxu0 0.0
        %530 = vmatpush1.msra.mxu0 0.0
        %531 = vmatprep.mubr.f32.mxu0 0.0
        %532 = vmatmul.mubr.f32.gmra.mrb[0].mxu0 %v465
        %v533 = vpop.f32.mrb[0].mxu0
        %v534 = vadd.f32 0.0, %v533
        %v535 = vpop.f32.mrb[0].mxu0
        %536 = vdwg.mxu0
        %v537 = vld [vmem:[%s3] sm:$0xff]
        %v538 = vld [vmem:[%s3 + $0x8] sm:$0xff]
        %v539 = vld [vmem:[%s3 + $0x10] sm:$0xff]
        %v540 = vld [vmem:[%s3 + $0x18] sm:$0xff]
        %v541 = vld [vmem:[%s3 + $0x20] sm:$0xff]
        %v542 = vld [vmem:[%s3 + $0x28] sm:$0xff]
        %v543 = vld [vmem:[%s3 + $0x30] sm:$0xff]
        %v544 = vld [vmem:[%s3 + $0x38] sm:$0xff]
        %v546 = vsel %vm362, %v534, 0
        %548 = vmatprep.subr.mxu0 0.0
        %549 = vmatpush1.msra.mxu0 %v541
        %550 = vmatprep.subr.mxu0 0.0
        %551 = vmatpush1.msra.mxu0 %v542
        %552 = vmatprep.subr.mxu0 0.0
        %553 = vmatpush1.msra.mxu0 %v543
        %554 = vmatprep.subr.mxu0 0.0
        %555 = vmatpush1.msra.mxu0 %v544
        %556 = vmatprep.subr.mxu0 0.0
        %557 = vmatpush1.msra.mxu0 0.0
        %558 = vmatprep.subr.mxu0 0.0
        %559 = vmatpush1.msra.mxu0 0.0
        %560 = vmatprep.subr.mxu0 0.0
        %561 = vmatpush1.msra.mxu0 0.0
        %562 = vmatprep.subr.mxu0 0.0
        %563 = vmatpush1.msra.mxu0 0.0
        %564 = vmatprep.subr.mxu0 0.0
        %565 = vmatpush1.msra.mxu0 0.0
        %566 = vmatprep.subr.mxu0 0.0
        %567 = vmatpush1.msra.mxu0 0.0
        %568 = vmatprep.subr.mxu0 0.0
        %569 = vmatpush1.msra.mxu0 0.0
        %570 = vmatprep.subr.mxu0 0.0
        %571 = vmatpush1.msra.mxu0 0.0
        %572 = vmatprep.subr.mxu0 0.0
        %573 = vmatpush1.msra.mxu0 0.0
        %574 = vmatprep.subr.mxu0 0.0
        %575 = vmatpush1.msra.mxu0 0.0
        %576 = vmatprep.subr.mxu0 0.0
        %577 = vmatpush1.msra.mxu0 0.0
        %578 = vmatprep.subr.mxu0 0.0
        %579 = vmatpush1.msra.mxu0 0.0
        %580 = vmatprep.subr.mxu0 0.0
        %581 = vmatpush1.msra.mxu0 0.0
        %582 = vmatprep.subr.mxu0 0.0
        %583 = vmatpush1.msra.mxu0 0.0
        %584 = vmatprep.subr.mxu0 0.0
        %585 = vmatpush1.msra.mxu0 0.0
        %586 = vmatprep.subr.mxu0 0.0
        %587 = vmatpush1.msra.mxu0 0.0
        %588 = vmatprep.subr.mxu0 0.0
        %589 = vmatpush1.msra.mxu0 0.0
        %590 = vmatprep.subr.mxu0 0.0
        %591 = vmatpush1.msra.mxu0 0.0
        %592 = vmatprep.subr.mxu0 0.0
        %593 = vmatpush1.msra.mxu0 0.0
        %594 = vmatprep.subr.mxu0 0.0
        %595 = vmatpush1.msra.mxu0 0.0
        %596 = vmatprep.subr.mxu0 0.0
        %597 = vmatpush1.msra.mxu0 0.0
        %598 = vmatprep.subr.mxu0 0.0
        %599 = vmatpush1.msra.mxu0 0.0
        %600 = vmatprep.subr.mxu0 0.0
        %601 = vmatpush1.msra.mxu0 0.0
        %602 = vmatprep.subr.mxu0 0.0
        %603 = vmatpush1.msra.mxu0 0.0
        %604 = vmatprep.subr.mxu0 0.0
        %605 = vmatpush1.msra.mxu0 0.0
        %606 = vmatprep.subr.mxu0 0.0
        %607 = vmatpush1.msra.mxu0 0.0
        %608 = vmatprep.subr.mxu0 0.0
        %609 = vmatpush1.msra.mxu0 0.0
        %610 = vmatprep.subr.mxu0 0.0
        %611 = vmatpush1.msra.mxu0 0.0
        %612 = vmatprep.mubr.f32.mxu0 0.0
        %613 = vmatmul.mubr.f32.gmra.mrb[0].mxu0 %v546
        %v614 = vpop.f32.mrb[0].mxu0
        %v615 = vadd.f32 0.0, %v614
        %v616 = vpop.f32.mrb[0].mxu0
        %617 = vdwg.mxu0
        %618 = vmatprep.subr.mxu0 0.0
        %619 = vmatpush1.msra.mxu0 %v537
        %620 = vmatprep.subr.mxu0 0.0
        %621 = vmatpush1.msra.mxu0 %v538
        %622 = vmatprep.subr.mxu0 0.0
        %623 = vmatpush1.msra.mxu0 %v539
        %624 = vmatprep.subr.mxu0 0.0
        %625 = vmatpush1.msra.mxu0 %v540
        %626 = vmatprep.subr.mxu0 0.0
        %627 = vmatpush1.msra.mxu0 0.0
        %628 = vmatprep.subr.mxu0 0.0
        %629 = vmatpush1.msra.mxu0 0.0
        %630 = vmatprep.subr.mxu0 0.0
        %631 = vmatpush1.msra.mxu0 0.0
        %632 = vmatprep.subr.mxu0 0.0
        %633 = vmatpush1.msra.mxu0 0.0
        %634 = vmatprep.subr.mxu0 0.0
        %635 = vmatpush1.msra.mxu0 0.0
        %636 = vmatprep.subr.mxu0 0.0
        %637 = vmatpush1.msra.mxu0 0.0
        %638 = vmatprep.subr.mxu0 0.0
        %639 = vmatpush1.msra.mxu0 0.0
        %640 = vmatprep.subr.mxu0 0.0
        %641 = vmatpush1.msra.mxu0 0.0
        %642 = vmatprep.subr.mxu0 0.0
        %643 = vmatpush1.msra.mxu0 0.0
        %644 = vmatprep.subr.mxu0 0.0
        %645 = vmatpush1.msra.mxu0 0.0
        %646 = vmatprep.subr.mxu0 0.0
        %647 = vmatpush1.msra.mxu0 0.0
        %648 = vmatprep.subr.mxu0 0.0
        %649 = vmatpush1.msra.mxu0 0.0
        %650 = vmatprep.subr.mxu0 0.0
        %651 = vmatpush1.msra.mxu0 0.0
        %652 = vmatprep.subr.mxu0 0.0
        %653 = vmatpush1.msra.mxu0 0.0
        %654 = vmatprep.subr.mxu0 0.0
        %655 = vmatpush1.msra.mxu0 0.0
        %656 = vmatprep.subr.mxu0 0.0
        %657 = vmatpush1.msra.mxu0 0.0
        %658 = vmatprep.subr.mxu0 0.0
        %659 = vmatpush1.msra.mxu0 0.0
        %660 = vmatprep.subr.mxu0 0.0
        %661 = vmatpush1.msra.mxu0 0.0
        %662 = vmatprep.subr.mxu0 0.0
        %663 = vmatpush1.msra.mxu0 0.0
        %664 = vmatprep.subr.mxu0 0.0
        %665 = vmatpush1.msra.mxu0 0.0
        %666 = vmatprep.subr.mxu0 0.0
        %667 = vmatpush1.msra.mxu0 0.0
        %668 = vmatprep.subr.mxu0 0.0
        %669 = vmatpush1.msra.mxu0 0.0
        %670 = vmatprep.subr.mxu0 0.0
        %671 = vmatpush1.msra.mxu0 0.0
        %672 = vmatprep.subr.mxu0 0.0
        %673 = vmatpush1.msra.mxu0 0.0
        %674 = vmatprep.subr.mxu0 0.0
        %675 = vmatpush1.msra.mxu0 0.0
        %676 = vmatprep.subr.mxu0 0.0
        %677 = vmatpush1.msra.mxu0 0.0
        %678 = vmatprep.subr.mxu0 0.0
        %679 = vmatpush1.msra.mxu0 0.0
        %680 = vmatprep.subr.mxu0 0.0
        %681 = vmatpush1.msra.mxu0 0.0
        %682 = vmatprep.mubr.f32.mxu0 0.0
        %683 = vmatmul.mubr.f32.gmra.mrb[0].mxu0 %v364
        %v684 = vpop.f32.mrb[0].mxu0
        %v685 = vadd.f32 %v615, %v684
        %v686 = vpop.f32.mrb[0].mxu0
        %687 = vdwg.mxu0
        %v688 = vtanh.pop %v685
        %689 = vst.msk [vmem:[%s328] sm:$0xff] %vm362, %v688
        %v690 = vld [vmem:[%s4] sm:$0xff]
        %v691 = vld [vmem:[%s4 + $0x8] sm:$0xff]
        %v692 = vld [vmem:[%s4 + $0x10] sm:$0xff]
        %v693 = vld [vmem:[%s4 + $0x18] sm:$0xff]
        %v694 = vld [vmem:[%s4 + $0x20] sm:$0xff]
        %v695 = vld [vmem:[%s4 + $0x28] sm:$0xff]
        %v696 = vld [vmem:[%s4 + $0x30] sm:$0xff]
        %v697 = vld [vmem:[%s4 + $0x38] sm:$0xff]
        %v699 = vsel %vm362, %v688, 0
        %701 = vmatprep.subr.mxu0 0.0
        %702 = vmatpush1.msra.mxu0 %v694
        %703 = vmatprep.subr.mxu0 0.0
        %704 = vmatpush1.msra.mxu0 %v695
        %705 = vmatprep.subr.mxu0 0.0
        %706 = vmatpush1.msra.mxu0 %v696
        %707 = vmatprep.subr.mxu0 0.0
        %708 = vmatpush1.msra.mxu0 %v697
        %709 = vmatprep.subr.mxu0 0.0
        %710 = vmatpush1.msra.mxu0 0.0
        %711 = vmatprep.subr.mxu0 0.0
        %712 = vmatpush1.msra.mxu0 0.0
        %713 = vmatprep.subr.mxu0 0.0
        %714 = vmatpush1.msra.mxu0 0.0
        %715 = vmatprep.subr.mxu0 0.0
        %716 = vmatpush1.msra.mxu0 0.0
        %717 = vmatprep.subr.mxu0 0.0
        %718 = vmatpush1.msra.mxu0 0.0
        %719 = vmatprep.subr.mxu0 0.0
        %720 = vmatpush1.msra.mxu0 0.0
        %721 = vmatprep.subr.mxu0 0.0
        %722 = vmatpush1.msra.mxu0 0.0
        %723 = vmatprep.subr.mxu0 0.0
        %724 = vmatpush1.msra.mxu0 0.0
        %725 = vmatprep.subr.mxu0 0.0
        %726 = vmatpush1.msra.mxu0 0.0
        %727 = vmatprep.subr.mxu0 0.0
        %728 = vmatpush1.msra.mxu0 0.0
        %729 = vmatprep.subr.mxu0 0.0
        %730 = vmatpush1.msra.mxu0 0.0
        %731 = vmatprep.subr.mxu0 0.0
        %732 = vmatpush1.msra.mxu0 0.0
        %733 = vmatprep.subr.mxu0 0.0
        %734 = vmatpush1.msra.mxu0 0.0
        %735 = vmatprep.subr.mxu0 0.0
        %736 = vmatpush1.msra.mxu0 0.0
        %737 = vmatprep.subr.mxu0 0.0
        %738 = vmatpush1.msra.mxu0 0.0
        %739 = vmatprep.subr.mxu0 0.0
        %740 = vmatpush1.msra.mxu0 0.0
        %741 = vmatprep.subr.mxu0 0.0
        %742 = vmatpush1.msra.mxu0 0.0
        %743 = vmatprep.subr.mxu0 0.0
        %744 = vmatpush1.msra.mxu0 0.0
        %745 = vmatprep.subr.mxu0 0.0
        %746 = vmatpush1.msra.mxu0 0.0
        %747 = vmatprep.subr.mxu0 0.0
        %748 = vmatpush1.msra.mxu0 0.0
        %749 = vmatprep.subr.mxu0 0.0
        %750 = vmatpush1.msra.mxu0 0.0
        %751 = vmatprep.subr.mxu0 0.0
        %752 = vmatpush1.msra.mxu0 0.0
        %753 = vmatprep.subr.mxu0 0.0
        %754 = vmatpush1.msra.mxu0 0.0
        %755 = vmatprep.subr.mxu0 0.0
        %756 = vmatpush1.msra.mxu0 0.0
        %757 = vmatprep.subr.mxu0 0.0
        %758 = vmatpush1.msra.mxu0 0.0
        %759 = vmatprep.subr.mxu0 0.0
        %760 = vmatpush1.msra.mxu0 0.0
        %761 = vmatprep.subr.mxu0 0.0
        %762 = vmatpush1.msra.mxu0 0.0
        %763 = vmatprep.subr.mxu0 0.0
        %764 = vmatpush1.msra.mxu0 0.0
        %765 = vmatprep.mubr.f32.mxu0 0.0
        %766 = vmatmul.mubr.f32.gmra.mrb[0].mxu0 %v699
        %v767 = vpop.f32.mrb[0].mxu0
        %v768 = vadd.f32 0.0, %v767
        %v769 = vpop.f32.mrb[0].mxu0
        %770 = vdwg.mxu0
        %771 = vmatprep.subr.mxu0 0.0
        %772 = vmatpush1.msra.mxu0 %v690
        %773 = vmatprep.subr.mxu0 0.0
        %774 = vmatpush1.msra.mxu0 %v691
        %775 = vmatprep.subr.mxu0 0.0
        %776 = vmatpush1.msra.mxu0 %v692
        %777 = vmatprep.subr.mxu0 0.0
        %778 = vmatpush1.msra.mxu0 %v693
        %779 = vmatprep.subr.mxu0 0.0
        %780 = vmatpush1.msra.mxu0 0.0
        %781 = vmatprep.subr.mxu0 0.0
        %782 = vmatpush1.msra.mxu0 0.0
        %783 = vmatprep.subr.mxu0 0.0
        %784 = vmatpush1.msra.mxu0 0.0
        %785 = vmatprep.subr.mxu0 0.0
        %786 = vmatpush1.msra.mxu0 0.0
        %787 = vmatprep.subr.mxu0 0.0
        %788 = vmatpush1.msra.mxu0 0.0
        %789 = vmatprep.subr.mxu0 0.0
        %790 = vmatpush1.msra.mxu0 0.0
        %791 = vmatprep.subr.mxu0 0.0
        %792 = vmatpush1.msra.mxu0 0.0
        %793 = vmatprep.subr.mxu0 0.0
        %794 = vmatpush1.msra.mxu0 0.0
        %795 = vmatprep.subr.mxu0 0.0
        %796 = vmatpush1.msra.mxu0 0.0
        %797 = vmatprep.subr.mxu0 0.0
        %798 = vmatpush1.msra.mxu0 0.0
        %799 = vmatprep.subr.mxu0 0.0
        %800 = vmatpush1.msra.mxu0 0.0
        %801 = vmatprep.subr.mxu0 0.0
        %802 = vmatpush1.msra.mxu0 0.0
        %803 = vmatprep.subr.mxu0 0.0
        %804 = vmatpush1.msra.mxu0 0.0
        %805 = vmatprep.subr.mxu0 0.0
        %806 = vmatpush1.msra.mxu0 0.0
        %807 = vmatprep.subr.mxu0 0.0
        %808 = vmatpush1.msra.mxu0 0.0
        %809 = vmatprep.subr.mxu0 0.0
        %810 = vmatpush1.msra.mxu0 0.0
        %811 = vmatprep.subr.mxu0 0.0
        %812 = vmatpush1.msra.mxu0 0.0
        %813 = vmatprep.subr.mxu0 0.0
        %814 = vmatpush1.msra.mxu0 0.0
        %815 = vmatprep.subr.mxu0 0.0
        %816 = vmatpush1.msra.mxu0 0.0
        %817 = vmatprep.subr.mxu0 0.0
        %818 = vmatpush1.msra.mxu0 0.0
        %819 = vmatprep.subr.mxu0 0.0
        %820 = vmatpush1.msra.mxu0 0.0
        %821 = vmatprep.subr.mxu0 0.0
        %822 = vmatpush1.msra.mxu0 0.0
        %823 = vmatprep.subr.mxu0 0.0
        %824 = vmatpush1.msra.mxu0 0.0
        %825 = vmatprep.subr.mxu0 0.0
        %826 = vmatpush1.msra.mxu0 0.0
        %827 = vmatprep.subr.mxu0 0.0
        %828 = vmatpush1.msra.mxu0 0.0
        %829 = vmatprep.subr.mxu0 0.0
        %830 = vmatpush1.msra.mxu0 0.0
        %831 = vmatprep.subr.mxu0 0.0
        %832 = vmatpush1.msra.mxu0 0.0
        %833 = vmatprep.subr.mxu0 0.0
        %834 = vmatpush1.msra.mxu0 0.0
        %835 = vmatprep.mubr.f32.mxu0 0.0
        %836 = vmatmul.mubr.f32.gmra.mrb[0].mxu0 %v364
        %v837 = vpop.f32.mrb[0].mxu0
        %v838 = vadd.f32 %v768, %v837
        %v839 = vpop.f32.mrb[0].mxu0
        %840 = vdwg.mxu0
        %v841 = vld [vmem:[#allocation2] sm:$0x1]
        %v843 = vlaneseq
        %v844 = vshrl.u32 %v843, 7
        %v845 = vsub.s32 0, %v844
        %v846 = vrot.slane %v841, %v845
        %v848 = vadd.f32 %v838, %v846
        %v849 = vxor.u32 %v848, 2147483648
        %v850 = vmul.f32 %v849, 1.442695
        %v851 = vpow.pop %v850
        %v852 = vadd.f32 %v851, 1.0
        %v853 = vrcp.pop %v852
        %v854 = vmul.f32 1.0, %v853
        %vm855 = vcmask 7168
        %856 = vst.msk [vmem:[%s357] sm:$0xff] %vm855, %v854
        %s857 = sand.u32 %s177, 1
        %s858 = scalar_lea.sflag [#allocation4], %s857
        %s859 = sand.u32 %s177, 1
        %s860 = smul.addr %s859, 8
        %s861 = scalar_lea.vmem [#allocation3], %s860
        %s862 = sand.u32 %s203, 1
        %s863 = scalar_lea.sflag [#allocation6], %s862
        %s864 = sand.u32 %s203, 1
        %s865 = smul.addr %s864, 8
        %s866 = scalar_lea.vmem [#allocation5], %s865
        %p867 = scmp.lt.s32.totalorder %s28, 1
        %s868 = scalar_select %p867, %s28, 1
        %s869 = smul.addr %s868, 8
        %s870 = scalar_lea.vmem %s8, %s869
        // Predicated region
        $region45: #{tpu_custom_call.1} parent=43 // pred_check
          %p871 = pneg %p187
        $region46: #{tpu_custom_call.1} parent=43 // pred_check_branch
          %873 = sbr.rel (%p871) target = $region48
        $region47: #{tpu_custom_call.1} parent=43 // pred_region
          %s875 = ssub.s32 128, 128
          %876 = vsyncadd %s858, %s875
          %s877 = smul.addr %s28, 128
          %s878 = scalar_lea.hbm %s6, %s877
          %s880 = sshll.u32 %s861, 4
          %s881 = int_to_ptr.vmem [resolvable:$true] %s880
          %883 = dma.vmem_to_hbm [thread:$0]  %s881, 128, %s878, %s858
        $region48: #{tpu_custom_call.1} parent=43 // pred_fallthru
          _
        // Predicated region
        $region49: #{tpu_custom_call.1} parent=43 // pred_check
          %p884 = pneg %p213
        $region50: #{tpu_custom_call.1} parent=43 // pred_check_branch
          %886 = sbr.rel (%p884) target = $region52
        $region51: #{tpu_custom_call.1} parent=43 // pred_region
          %s888 = ssub.s32 128, 128
          %889 = vsyncadd %s863, %s888
          %s890 = smul.addr %s28, 128
          %s891 = scalar_lea.hbm %s7, %s890
          %s893 = sshll.u32 %s866, 4
          %s894 = int_to_ptr.vmem [resolvable:$true] %s893
          %896 = dma.vmem_to_hbm [thread:$0]  %s894, 128, %s891, %s863
        $region52: #{tpu_custom_call.1} parent=43 // pred_fallthru
          _
        // Predicated region
        $region53: #{tpu_custom_call.1} parent=43 // pred_check
          %p897 = pneg %p239
        $region54: #{tpu_custom_call.1} parent=43 // pred_check_branch
          %899 = sbr.rel (%p897) target = $region56
        $region55: #{tpu_custom_call.1} parent=43 // pred_region
          _
        $region56: #{tpu_custom_call.1} parent=43 // pred_fallthru
          _
      $region44: #{tpu_custom_call.1} parent=5 // pred_fallthru
        _
      %p900 = scmp.le.s32.totalorder 2, %s23
      // Predicated region
      $region57: #{tpu_custom_call.1} parent=5 // pred_check
        %p901 = pneg %p900
      $region58: #{tpu_custom_call.1} parent=5 // pred_check_branch
        %903 = sbr.rel (%p901) target = $region60
      $region59: #{tpu_custom_call.1} parent=5 // pred_region
        %s904 = ssub.s32 %s23, 2
        // Predicated region
        $region61: #{tpu_custom_call.1} parent=59 // pred_check
          %p905 = pneg %p193
        $region62: #{tpu_custom_call.1} parent=59 // pred_check_branch
          %907 = sbr.rel (%p905) target = $region64
        $region63: #{tpu_custom_call.1} parent=59 // pred_region
          %s908 = sand.u32 %s178, 1
          %s909 = scalar_lea.sflag [#allocation4], %s908
          %s910 = sand.u32 %s178, 1
          %s911 = smul.addr %s910, 8
          %s912 = scalar_lea.vmem [#allocation3], %s911
          %913 = dma.done %s909, 128
        $region64: #{tpu_custom_call.1} parent=59 // pred_fallthru
          _
        // Predicated region
        $region65: #{tpu_custom_call.1} parent=59 // pred_check
          %p914 = pneg %p219
        $region66: #{tpu_custom_call.1} parent=59 // pred_check_branch
          %916 = sbr.rel (%p914) target = $region68
        $region67: #{tpu_custom_call.1} parent=59 // pred_region
          %s917 = sand.u32 %s204, 1
          %s918 = scalar_lea.sflag [#allocation6], %s917
          %s919 = sand.u32 %s204, 1
          %s920 = smul.addr %s919, 8
          %s921 = scalar_lea.vmem [#allocation5], %s920
          %922 = dma.done %s918, 128
        $region68: #{tpu_custom_call.1} parent=59 // pred_fallthru
          _
        // Predicated region
        $region69: #{tpu_custom_call.1} parent=59 // pred_check
          %p923 = pneg %p245
        $region70: #{tpu_custom_call.1} parent=59 // pred_check_branch
          %925 = sbr.rel (%p923) target = $region72
        $region71: #{tpu_custom_call.1} parent=59 // pred_region
          %p926 = scmp.lt.s32.totalorder %s29, 1
          %s927 = scalar_select %p926, %s29, 1
          %s928 = smul.addr %s927, 8
          %s929 = scalar_lea.vmem %s8, %s928
        $region72: #{tpu_custom_call.1} parent=59 // pred_fallthru
          _
      $region60: #{tpu_custom_call.1} parent=5 // pred_fallthru
        _
    $region6: #{tpu_custom_call.1} parent=1 // loop_footer
      %s27 = sadd.s32 1, %s23
    $region7: #{tpu_custom_call.1} parent=1 // loop_footer_branch
      %22 = sbr.rel target = $region3
    $region8: #{tpu_custom_call.1} parent=1 // loop_exit
      _
    %930 = vsyncpa [#allocation4], 1
    %s931 = scalar_lea.sflag [#allocation4], 1
    %932 = vsyncpa %s931, 1
    %933 = vsyncpa [#allocation6], 1
    %s934 = scalar_lea.sflag [#allocation6], 1
    %935 = vsyncpa %s934, 1

</llo_original>
